<compile_context>
chip_gen: v6e
topology: v6e:2x2x1
jax: 0.10.0
libtpu: 0.0.40
codegen_flags: <defaults>
</compile_context>

<pallas_src>
import jax
import jax.numpy as jnp
from jax import lax
from jax.experimental import pallas as pl
from jax.experimental.pallas import tpu as pltpu

BN_EPS = 1e-5
_MIB = 1024 * 1024


def _round_up(x, m):
    return ((x + m - 1) // m) * m


def _vmem_capacity_bytes():
    try:
        return int(pltpu.get_tpu_info().vmem_capacity_bytes)
    except Exception:
        return 64 * _MIB  # conservative fallback (v7x-class VMEM)


def _sent2featmap_kernel(x_ref, w_ref, p_ref, o_ref):
    """One feature tile of: Linear (bias-free) -> BatchNorm1d (batch stats).

    x_ref : (B, K)   full batch / full in_dim (constant block index -> DMA hoisted)
    w_ref : (K, TN)  slice of transposed Linear weight (native dtype -> MXU)
    p_ref : (2, TN)  packed [gamma; beta] slice (f32)
    o_ref : (B, TN)  output slice
    """
    # Native-dtype operands straight to the MXU, f32 accumulation.
    y = jnp.dot(x_ref[...], w_ref[...], preferred_element_type=jnp.float32)

    # Exact per-feature batch statistics (batch axis never tiled).
    inv_b = jnp.float32(1.0 / y.shape[0])
    mean = jnp.sum(y, axis=0, keepdims=True) * inv_b
    mean_sq = jnp.sum(y * y, axis=0, keepdims=True) * inv_b
    var = jnp.maximum(mean_sq - mean * mean, 0.0)  # biased variance (PyTorch norm)

    gamma = p_ref[0:1, :]
    beta = p_ref[1:2, :]
    scale = gamma * lax.rsqrt(var + BN_EPS)
    shift = beta - mean * scale
    o_ref[...] = (y * scale + shift).astype(o_ref.dtype)


def _pick_feature_tile(out_dim_128, B, K, w_bytes, x_bytes, o_bytes,
                       vmem_budget, tn_cap, two_tensorcores):
    """Largest lane-dense feature tile that (a) fits the VMEM budget and
    (b) divides the 128-padded feature width (so no padding beyond 128)."""
    # Per-feature-column VMEM: double-buffered weight tile, double-buffered
    # output tile, f32 (B, tn) temporaries (y / y*y), tiny packed-param tile.
    per_col = 2 * K * w_bytes + 2 * B * o_bytes + 2 * B * 4 + 2 * 2 * 4
    resident_x = 2 * B * K * x_bytes          # the x block is double-buffered too
    avail = max(vmem_budget - resident_x, per_col * 128)
    tn_max_units = max(1, min(tn_cap, avail // per_col) // 128)

    n_units = out_dim_128 // 128
    best = 1
    for d in range(1, n_units + 1):
        if n_units % d == 0 and d <= tn_max_units:
            best = d

    # On 2-TC chips keep >=2 grid steps for large tiles so both TensorCores
    # stream disjoint weight tiles (pure overhead on single-TC chips).
    if two_tensorcores and best == n_units and n_units > 1 and best * 128 >= 512:
        for d in range(n_units - 1, 0, -1):
            if n_units % d == 0:
                best = d
                break
    return 128 * best


def sent2featmap_forward(x, weight_t, bias, gamma, beta, *, row, col, channel):
    """x: (B, in_dim) -> (B, channel, row, col).  weight_t is (in_dim, out_dim).

    `bias` is accepted for API fidelity but is mathematically redundant under
    training-mode BatchNorm (batch statistics cancel any per-feature constant
    shift exactly), so it is not streamed into the kernel.
    """
    del bias
    B, K = x.shape
    out_dim = row * col * channel
    assert weight_t.shape == (K, out_dim)

    w_bytes = jnp.dtype(weight_t.dtype).itemsize
    x_bytes = jnp.dtype(x.dtype).itemsize
    o_bytes = x_bytes

    vmem_cap = _vmem_capacity_bytes()
    two_tensorcores = vmem_cap < 100 * _MIB       # v7x-class: 64 MiB VMEM, 2 TCs
    vmem_limit = max(32 * _MIB, min(int(vmem_cap * 0.75), 100 * _MIB))
    vmem_budget = vmem_limit - 4 * _MIB
    tn_cap = 2048 if vmem_cap >= 100 * _MIB else 1024

    # Pad the feature axis only to the lane width (128); tn divides this width.
    out_dim_128 = _round_up(out_dim, 128)
    pad = out_dim_128 - out_dim
    if pad:
        weight_t = jnp.pad(weight_t, ((0, 0), (0, pad)))
        gamma = jnp.pad(gamma, (0, pad))
        beta = jnp.pad(beta, (0, pad))

    tn = _pick_feature_tile(out_dim_128, B, K, w_bytes, x_bytes, o_bytes,
                            vmem_budget, tn_cap, two_tensorcores)
    grid = (out_dim_128 // tn,)

    # Packed per-feature params: one small DMA per step instead of three.
    params = jnp.stack([gamma.astype(jnp.float32), beta.astype(jnp.float32)], axis=0)

    cost = pl.CostEstimate(
        flops=2 * B * K * out_dim_128 + 8 * B * out_dim_128,
        bytes_accessed=(B * K * x_bytes + K * out_dim_128 * w_bytes
                        + 2 * out_dim_128 * 4 + B * out_dim_128 * o_bytes),
        transcendentals=out_dim_128,
    )

    y = pl.pallas_call(
        _sent2featmap_kernel,
        out_shape=jax.ShapeDtypeStruct((B, out_dim_128), x.dtype),
        grid_spec=pltpu.PrefetchScalarGridSpec(
            num_scalar_prefetch=0,
            grid=grid,
            in_specs=[
                pl.BlockSpec((B, K), lambda j: (0, 0)),    # x: resident full block
                pl.BlockSpec((K, tn), lambda j: (0, j)),   # W^T feature tile
                pl.BlockSpec((2, tn), lambda j: (0, j)),   # packed [gamma; beta]
            ],
            out_specs=pl.BlockSpec((B, tn), lambda j: (0, j)),
        ),
        compiler_params=pltpu.CompilerParams(
            dimension_semantics=("parallel",),
            vmem_limit_bytes=vmem_limit,
        ),
        cost_estimate=cost,
    )(x, weight_t, params)

    if pad:
        y = y[:, :out_dim]

    # PyTorch: output.view(-1, channel, row, col) -> NCHW (pure view; plain JAX)
    return y.reshape(B, channel, row, col)


if __name__ == "__main__":
    # Small shapes consistent with the module:
    #   in_dim=32, row=4, col=4, channel=8 -> out_dim = 4*4*8 = 128, batch=8
    B, in_dim, row, col, channel = 8, 32, 4, 4, 8
    out_dim = row * col * channel

    key = jax.random.PRNGKey(0)
    k_x, k_w, k_b, k_g, k_be = jax.random.split(key, 5)

    x = jax.random.normal(k_x, (B, in_dim), dtype=jnp.float32)

    # Deterministic parameter init (Linear weight stored transposed: (in_dim, out_dim)).
    bound = 1.0 / (in_dim ** 0.5)
    weight_t = jax.random.uniform(k_w, (in_dim, out_dim), jnp.float32, -bound, bound)
    bias = jax.random.uniform(k_b, (out_dim,), jnp.float32, -bound, bound)
    gamma = jnp.ones((out_dim,), jnp.float32) + 0.1 * jax.random.normal(k_g, (out_dim,))
    beta = 0.1 * jax.random.normal(k_be, (out_dim,), dtype=jnp.float32)

    out = sent2featmap_forward(
        x, weight_t, bias, gamma, beta, row=row, col=col, channel=channel)
    out = jax.block_until_ready(out)

    # Pure-JAX reference (WITH the Linear bias, which training-mode BN cancels).
    y_ref = x @ weight_t + bias
    mu = y_ref.mean(0, keepdims=True)
    var = ((y_ref - mu) ** 2).mean(0, keepdims=True)
    y_ref = (y_ref - mu) / jnp.sqrt(var + BN_EPS) * gamma + beta
    y_ref = y_ref.reshape(B, channel, row, col)

    assert out.shape == (B, channel, row, col)
    assert jnp.max(jnp.abs(out - y_ref)) < 2e-4

    print("KERNEL_OK")
</pallas_src>

<mosaic_0001>
module attributes {stable_mosaic.version = 11 : i64} {
  func.func @_sent2featmap_kernel(%arg0: i32, %arg1: memref<8x32xf32, #tpu.memory_space<vmem>>, %arg2: memref<32x128xf32, #tpu.memory_space<vmem>>, %arg3: memref<2x128xf32, #tpu.memory_space<vmem>>, %arg4: memref<8x128xf32, #tpu.memory_space<vmem>>) attributes {dimension_semantics = [#tpu.dimension_semantics<parallel>], iteration_bounds = array<i64: 1>, scalar_prefetch = 0 : i64, scratch_operands = 0 : i64, tpu.core_type = #tpu.core_type<tc>, window_params = [{pipeline_mode = #tpu.pipeline_mode<synchronous>, transform_indices = @transform_0, window_bounds = array<i64: 8, 32>}, {transform_indices = @transform_1, window_bounds = array<i64: 32, 128>}, {transform_indices = @transform_2, window_bounds = array<i64: 2, 128>}, {transform_indices = @transform_3, window_bounds = array<i64: 8, 128>}]} {
    %c0 = arith.constant 0 : index
    %c0_0 = arith.constant 0 : index
    %0 = vector.load %arg1[%c0, %c0_0] : memref<8x32xf32, #tpu.memory_space<vmem>>, vector<8x32xf32>
    %c0_1 = arith.constant 0 : index
    %c0_2 = arith.constant 0 : index
    %1 = vector.load %arg2[%c0_1, %c0_2] : memref<32x128xf32, #tpu.memory_space<vmem>>, vector<32x128xf32>
    %cst = arith.constant dense<0.000000e+00> : vector<8x128xf32>
    %2 = tpu.matmul %0, %1, %cst {dimension_numbers = #tpu.dot_dimension_numbers<[1], [0], [0], [1], [0, 0, 1, 1], [], []>} : vector<8x32xf32>, vector<32x128xf32>, vector<8x128xf32> -> vector<8x128xf32>
    %cst_3 = arith.constant dense<0.000000e+00> : vector<128xf32>
    %3 = vector.multi_reduction <add>, %2, %cst_3 [0] : vector<8x128xf32> to vector<128xf32>
    %4 = vector.shape_cast %3 : vector<128xf32> to vector<1x128xf32>
    %cst_4 = arith.constant 1.250000e-01 : f32
    %5 = vector.broadcast %cst_4 : f32 to vector<1x128xf32>
    %6 = arith.mulf %4, %5 : vector<1x128xf32>
    %7 = arith.mulf %2, %2 : vector<8x128xf32>
    %cst_5 = arith.constant dense<0.000000e+00> : vector<128xf32>
    %8 = vector.multi_reduction <add>, %7, %cst_5 [0] : vector<8x128xf32> to vector<128xf32>
    %9 = vector.shape_cast %8 : vector<128xf32> to vector<1x128xf32>
    %cst_6 = arith.constant 1.250000e-01 : f32
    %10 = vector.broadcast %cst_6 : f32 to vector<1x128xf32>
    %11 = arith.mulf %9, %10 : vector<1x128xf32>
    %12 = arith.mulf %6, %6 : vector<1x128xf32>
    %13 = arith.subf %11, %12 : vector<1x128xf32>
    %cst_7 = arith.constant 0.000000e+00 : f32
    %14 = vector.broadcast %cst_7 : f32 to vector<1x128xf32>
    %15 = arith.maximumf %13, %14 : vector<1x128xf32>
    %c0_8 = arith.constant 0 : index
    %c0_9 = arith.constant 0 : index
    %16 = vector.load %arg3[%c0_8, %c0_9] : memref<2x128xf32, #tpu.memory_space<vmem>>, vector<1x128xf32>
    %c1 = arith.constant 1 : index
    %c0_10 = arith.constant 0 : index
    %17 = vector.load %arg3[%c1, %c0_10] : memref<2x128xf32, #tpu.memory_space<vmem>>, vector<1x128xf32>
    %cst_11 = arith.constant 9.99999974E-6 : f32
    %18 = vector.broadcast %cst_11 : f32 to vector<1x128xf32>
    %19 = arith.addf %15, %18 : vector<1x128xf32>
    %20 = math.rsqrt %19 : vector<1x128xf32>
    %21 = arith.mulf %16, %20 : vector<1x128xf32>
    %22 = arith.mulf %6, %21 : vector<1x128xf32>
    %23 = arith.subf %17, %22 : vector<1x128xf32>
    %24 = vector.broadcast %21 : vector<1x128xf32> to vector<8x128xf32>
    %25 = arith.mulf %2, %24 : vector<8x128xf32>
    %26 = vector.broadcast %23 : vector<1x128xf32> to vector<8x128xf32>
    %27 = arith.addf %25, %26 : vector<8x128xf32>
    %c0_12 = arith.constant 0 : index
    %c0_13 = arith.constant 0 : index
    %28 = vector.load %arg4[%c0_12, %c0_13] : memref<8x128xf32, #tpu.memory_space<vmem>>, vector<8x128xf32>
    tpu.vector_store %arg4[%c0_12, %c0_13], %27 {strides = array<i32>} : memref<8x128xf32, #tpu.memory_space<vmem>>, vector<8x128xf32>,
    return
  }
  func.func @transform_0(%arg0: i32) -> (i32, i32) {
    %c0_i32 = arith.constant 0 : i32
    %c0_i32_0 = arith.constant 0 : i32
    %c0_i32_1 = arith.constant 0 : i32
    return %c0_i32, %c0_i32_0 : i32, i32
  }
  func.func @transform_1(%arg0: i32) -> (i32, i32) {
    %c0_i32 = arith.constant 0 : i32
    %c0_i32_0 = arith.constant 0 : i32
    return %c0_i32, %arg0 : i32, i32
  }
  func.func @transform_2(%arg0: i32) -> (i32, i32) {
    %c0_i32 = arith.constant 0 : i32
    %c0_i32_0 = arith.constant 0 : i32
    return %c0_i32, %arg0 : i32, i32
  }
  func.func @transform_3(%arg0: i32) -> (i32, i32) {
    %c0_i32 = arith.constant 0 : i32
    %c0_i32_0 = arith.constant 0 : i32
    return %c0_i32, %arg0 : i32, i32
  }
}

</mosaic_0001>

<llo_original>
// kernel: tpu_custom_call.1
$region0: #{tpu_custom_call.1}
  #allocation0 [shape = 'u32[]', space=smem, size = 0x4, offset = 0x4, fixed_abs, tag = 'smem constant byte address 0x4 - core index']
  #allocation1 [shape = 'u32[144,128]{1,0:T(1,128)}', space=vmem, size = 0x12000, scoped, tag = 'internal scratch']
  %s0 = inlined_call_operand.hbm [shape: f32[8,32], index: 0, kind: input, shape index: {}]
  %s1 = inlined_call_operand.hbm [shape: f32[32,128], index: 1, kind: input, shape index: {}]
  %s2 = inlined_call_operand.vmem [shape: f32[2,128], index: 2, kind: input, shape index: {}]
  %s3 = inlined_call_operand.hbm [shape: f32[8,128], index: 3, kind: output, shape index: {}]
  %s4 = sld [smem:[#allocation0]]
  $region30: #{tpu_custom_call.1} parent=0
    _
  %s6 = ssub.s32 1, %s4
  %s7 = scalar_select 0, %s6, %s4
  $region1: #{tpu_custom_call.1} parent=0
    #allocation2 [shape = 'u8[4096]{0}', space=vmem, size = 0x1000, scoped, tag = 'input window, operand 0, single buffered']
    #allocation3 [shape = 's32[1]{0}', space=sflag, size = 0x4, scoped, tag = 'scoped memory for tpu_custom_call.1']
    #allocation4 [shape = 's32[1]{0}', space=sflag, size = 0x4, scoped, tag = 'scoped memory for tpu_custom_call.1']
    #allocation5 [shape = 'u8[16384]{0}', space=vmem, size = 0x4000, scoped, tag = 'input window, operand 1, single buffered']
    #allocation6 [shape = 's32[1]{0}', space=sflag, size = 0x4, scoped, tag = 'scoped memory for tpu_custom_call.1']
    #allocation7 [shape = 'u8[4096]{0}', space=vmem, size = 0x1000, scoped, tag = 'output window, operand 0, single buffered']
    %8 = vsyncpa [#allocation3], 0
    %9 = vsyncpa [#allocation6], 0
    %10 = vsyncpa [#allocation4], 0
    // Predicated region
    $region2: #{tpu_custom_call.1} parent=1 // pred_check
      _
    $region3: #{tpu_custom_call.1} parent=1 // pred_check_branch
      %12 = sbr.rel (0) target = $region5
    $region4: #{tpu_custom_call.1} parent=1 // pred_region
      %s14 = ssub.s32 128, 128
      %15 = vsyncadd [#allocation3], %s14
      %s17 = sshll.u32 [#allocation2], 4
      %s18 = int_to_ptr.vmem [resolvable:$true] %s17
      %20 = dma.hbm_to_vmem [thread:$0]  %s0, 128, %s18, [#allocation3]
    $region5: #{tpu_custom_call.1} parent=1 // pred_fallthru
      _
    // Predicated region
    $region6: #{tpu_custom_call.1} parent=1 // pred_check
      _
    $region7: #{tpu_custom_call.1} parent=1 // pred_check_branch
      %22 = sbr.rel (0) target = $region9
    $region8: #{tpu_custom_call.1} parent=1 // pred_region
      %s24 = ssub.s32 512, 512
      %25 = vsyncadd [#allocation6], %s24
      %s26 = sshll.u32 [#allocation5], 4
      %s27 = int_to_ptr.vmem [resolvable:$true] %s26
      %32 = dma.hbm_to_vmem [thread:$0]  %s1, 512, %s27, [#allocation6], 128, 128, 8
    $region9: #{tpu_custom_call.1} parent=1 // pred_fallthru
      _
    // Predicated region
    $region10: #{tpu_custom_call.1} parent=1 // pred_check
      _
    $region11: #{tpu_custom_call.1} parent=1 // pred_check_branch
      %34 = sbr.rel (0) target = $region13
    $region12: #{tpu_custom_call.1} parent=1 // pred_region
      _
    $region13: #{tpu_custom_call.1} parent=1 // pred_fallthru
      _
    // Predicated region
    $region14: #{tpu_custom_call.1} parent=1 // pred_check
      _
    $region15: #{tpu_custom_call.1} parent=1 // pred_check_branch
      %36 = sbr.rel (0) target = $region17
    $region16: #{tpu_custom_call.1} parent=1 // pred_region
      %37 = dma.done [#allocation3], 128
    $region17: #{tpu_custom_call.1} parent=1 // pred_fallthru
      _
    // Predicated region
    $region18: #{tpu_custom_call.1} parent=1 // pred_check
      _
    $region19: #{tpu_custom_call.1} parent=1 // pred_check_branch
      %39 = sbr.rel (0) target = $region21
    $region20: #{tpu_custom_call.1} parent=1 // pred_region
      %40 = dma.done [#allocation6], 512
    $region21: #{tpu_custom_call.1} parent=1 // pred_fallthru
      _
    %v41 = vld [vmem:[#allocation2] sm:$0xff]
    %v42 = vld [vmem:[#allocation5] sm:$0xff]
    %v43 = vld [vmem:[#allocation5 + $0x8] sm:$0xff]
    %v44 = vld [vmem:[#allocation5 + $0x10] sm:$0xff]
    %v45 = vld [vmem:[#allocation5 + $0x18] sm:$0xff]
    %vm46 = vcmask 261120
    %v48 = vsel %vm46, %v41, 0
    %50 = vmatprep.subr.mxu0 0.0
    %51 = vmatpush1.msra.mxu0 0.0
    %52 = vmatprep.subr.mxu0 0.0
    %53 = vmatpush1.msra.mxu0 0.0
    %54 = vmatprep.subr.mxu0 0.0
    %55 = vmatpush1.msra.mxu0 0.0
    %56 = vmatprep.subr.mxu0 0.0
    %57 = vmatpush1.msra.mxu0 0.0
    %58 = vmatprep.subr.mxu0 0.0
    %59 = vmatpush1.msra.mxu0 0.0
    %60 = vmatprep.subr.mxu0 0.0
    %61 = vmatpush1.msra.mxu0 0.0
    %62 = vmatprep.subr.mxu0 0.0
    %63 = vmatpush1.msra.mxu0 0.0
    %64 = vmatprep.subr.mxu0 0.0
    %65 = vmatpush1.msra.mxu0 0.0
    %66 = vmatprep.subr.mxu0 0.0
    %67 = vmatpush1.msra.mxu0 0.0
    %68 = vmatprep.subr.mxu0 0.0
    %69 = vmatpush1.msra.mxu0 0.0
    %70 = vmatprep.subr.mxu0 0.0
    %71 = vmatpush1.msra.mxu0 0.0
    %72 = vmatprep.subr.mxu0 0.0
    %73 = vmatpush1.msra.mxu0 0.0
    %74 = vmatprep.subr.mxu0 0.0
    %75 = vmatpush1.msra.mxu0 %v45
    %76 = vmatprep.subr.mxu0 0.0
    %77 = vmatpush1.msra.mxu0 %v44
    %78 = vmatprep.subr.mxu0 0.0
    %79 = vmatpush1.msra.mxu0 %v43
    %80 = vmatprep.subr.mxu0 0.0
    %81 = vmatpush1.msra.mxu0 %v42
    %82 = vmatprep.subr.mxu0 0.0
    %83 = vmatpush2.msra.mxu0 0.0
    %84 = vmatprep.subr.mxu0 0.0
    %85 = vmatpush2.msra.mxu0 0.0
    %86 = vmatprep.subr.mxu0 0.0
    %87 = vmatpush2.msra.mxu0 0.0
    %88 = vmatprep.subr.mxu0 0.0
    %89 = vmatpush2.msra.mxu0 0.0
    %90 = vmatprep.subr.mxu0 0.0
    %91 = vmatpush2.msra.mxu0 0.0
    %92 = vmatprep.subr.mxu0 0.0
    %93 = vmatpush2.msra.mxu0 0.0
    %94 = vmatprep.subr.mxu0 0.0
    %95 = vmatpush2.msra.mxu0 0.0
    %96 = vmatprep.subr.mxu0 0.0
    %97 = vmatpush2.msra.mxu0 0.0
    %98 = vmatprep.subr.mxu0 0.0
    %99 = vmatpush2.msra.mxu0 0.0
    %100 = vmatprep.subr.mxu0 0.0
    %101 = vmatpush2.msra.mxu0 0.0
    %102 = vmatprep.subr.mxu0 0.0
    %103 = vmatpush2.msra.mxu0 0.0
    %104 = vmatprep.subr.mxu0 0.0
    %105 = vmatpush2.msra.mxu0 0.0
    %106 = vmatprep.subr.mxu0 0.0
    %107 = vmatpush2.msra.mxu0 0.0
    %108 = vmatprep.subr.mxu0 0.0
    %109 = vmatpush2.msra.mxu0 0.0
    %110 = vmatprep.subr.mxu0 0.0
    %111 = vmatpush2.msra.mxu0 0.0
    %112 = vmatprep.subr.mxu0 0.0
    %113 = vmatpush2.msra.mxu0 0.0
    %114 = vmatprep.mubr.f32.mxu0 0.0
    %115 = vmatmul.mubr.f32.gmra.mxu0 %v48
    %v116 = vpop.f32.mrf.mxu0
    %v117 = vadd.f32 0.0, %v116
    %v118 = vpop.f32.mrf.mxu0
    %119 = vdwg.mxu0
    %v120 = vrot.slane %v117, 4
    %v121 = vadd.f32 %v117, %v120
    %v122 = vrot.slane %v121, 2
    %v123 = vadd.f32 %v121, %v122
    %v124 = vrot.slane %v123, 1
    %v125 = vadd.f32 %v123, %v124
    %v126 = vmul.f32 %v125, 0.125
    %v127 = vmul.f32 %v117, %v117
    %v128 = vrot.slane %v127, 4
    %v129 = vadd.f32 %v127, %v128
    %v130 = vrot.slane %v129, 2
    %v131 = vadd.f32 %v129, %v130
    %v132 = vrot.slane %v131, 1
    %v133 = vadd.f32 %v131, %v132
    %v134 = vmul.f32 %v133, 0.125
    %v135 = vmul.f32 %v126, %v126
    %v136 = vsub.f32 %v134, %v135
    %v137 = vmax.f32 %v136, 0.0
    %v138 = vld [vmem:[%s2] sm:$0x1]
    %v139 = vld [vmem:[%s2 + $0x1] sm:$0x1]
    %v140 = vadd.f32 %v137, 1e-05
    %v141 = vrsqrt.pop %v140
    %v142 = vmul.f32 %v138, %v141
    %v143 = vmul.f32 %v126, %v142
    %v144 = vsub.f32 %v139, %v143
    %v145 = vlaneseq
    %v146 = vshrl.u32 %v145, 7
    %v147 = vsub.s32 0, %v146
    %v148 = vrot.slane %v142, %v147
    %v149 = vmul.f32 %v117, %v148
    %v150 = vlaneseq
    %v151 = vshrl.u32 %v150, 7
    %v152 = vsub.s32 0, %v151
    %v153 = vrot.slane %v144, %v152
    %v154 = vadd.f32 %v149, %v153
    %155 = vst [vmem:[#allocation7] sm:$0xff] %v154
    // Predicated region
    $region22: #{tpu_custom_call.1} parent=1 // pred_check
      _
    $region23: #{tpu_custom_call.1} parent=1 // pred_check_branch
      %157 = sbr.rel (0) target = $region25
    $region24: #{tpu_custom_call.1} parent=1 // pred_region
      %s159 = ssub.s32 128, 128
      %160 = vsyncadd [#allocation4], %s159
      %s162 = sshll.u32 [#allocation7], 4
      %s163 = int_to_ptr.vmem [resolvable:$true] %s162
      %165 = dma.vmem_to_hbm [thread:$0]  %s163, 128, %s3, [#allocation4]
    $region25: #{tpu_custom_call.1} parent=1 // pred_fallthru
      _
    // Predicated region
    $region26: #{tpu_custom_call.1} parent=1 // pred_check
      _
    $region27: #{tpu_custom_call.1} parent=1 // pred_check_branch
      %167 = sbr.rel (0) target = $region29
    $region28: #{tpu_custom_call.1} parent=1 // pred_region
      %168 = dma.done [#allocation4], 128
    $region29: #{tpu_custom_call.1} parent=1 // pred_fallthru
      _
    %169 = vsyncpa [#allocation3], 1
    %170 = vsyncpa [#allocation6], 1
    %171 = vsyncpa [#allocation4], 1

</llo_original>
